<compile_context>
chip_gen: v5e
topology: v5e:2x2
jax: 0.10.0
libtpu: 0.0.40
codegen_flags: <defaults>
</compile_context>

<pallas_src>
import jax
import jax.numpy as jnp
from jax.experimental import pallas as pl
from jax.experimental.pallas import tpu as pltpu


def _make_kernel(d, tr, k_steps, k_per, c_chunks, need_mask):
    """Fused BCE + IoU + Dice partial-sum kernel.

    Per grid step (i, c, kk) it consumes a (1, TR, 128) tile of sample i and
    accumulates five per-lane quantities into the resident (1, 5, 1, 128)
    output block for (sample, chunk):
      0: sum(p * t)           (dice numerator)
      1: sum(p + t)           (dice denominator)
      2: sum(bce_elementwise)
      3: count(in_ & tg_)     (IoU intersection, reference's double-sigmoid threshold)
      4: count(in_ | tg_)     (IoU union)
    """
    last_c = c_chunks - 1
    last_k = k_per - 1

    def accumulate(o_ref, x, t, valid):
        # Single shared e = exp(-|x|) feeds sigmoid, its reciprocal and the
        # softplus term: {exp, rcp, log1p} on the EUP instead of two sigmoids
        # plus exp plus log1p.  (pl.reciprocal(..., approx=True) would shave a
        # bit more but loosens the dice sums; exact divide kept.)
        e = jnp.exp(-jnp.abs(x))
        inv = 1.0 / (1.0 + e)
        p = jnp.where(x >= 0.0, inv, e * inv)            # == sigmoid(x)
        bce_el = jnp.maximum(x, 0.0) - x * t + jnp.log1p(e)
        # Faithful IOULoss quirk: sigmoid(sigmoid(x)) > 0.5.  sigmoid is
        # monotone with sigmoid(0) = 0.5, so this is p > 0 without the second
        # EUP sigmoid (differs only where sigmoid underflows at f32 edges).
        in_b = p > 0.0
        tg_b = t > 0.5
        if valid is not None:
            p = jnp.where(valid, p, 0.0)
            t = jnp.where(valid, t, 0.0)
            bce_el = jnp.where(valid, bce_el, 0.0)
            in_b = in_b & valid
            tg_b = tg_b & valid
        # Per-step sublane reduction (XLU) -> one-vreg RMW per quantity; no
        # full-tile accumulator loads/stores in the steady state.
        o_ref[0, 0] += jnp.sum(p * t, axis=0, keepdims=True)
        o_ref[0, 1] += jnp.sum(p + t, axis=0, keepdims=True)
        o_ref[0, 2] += jnp.sum(bce_el, axis=0, keepdims=True)
        o_ref[0, 3] += jnp.sum((in_b & tg_b).astype(jnp.float32), axis=0, keepdims=True)
        o_ref[0, 4] += jnp.sum((in_b | tg_b).astype(jnp.float32), axis=0, keepdims=True)

    def kernel(x_ref, t_ref, o_ref):
        kk = pl.program_id(2)

        @pl.when(kk == 0)
        def _init():
            o_ref[...] = jnp.zeros_like(o_ref)

        x = x_ref[0].astype(jnp.float32)   # (TR, 128)
        t = t_ref[0].astype(jnp.float32)   # (TR, 128)

        if not need_mask:
            accumulate(o_ref, x, t, None)
        else:
            # Only the globally-last row tile can contain padded / over-read
            # elements; every other step runs the unmasked fast path.
            c = pl.program_id(1)
            is_last = jnp.logical_and(c == last_c, kk == last_k)

            @pl.when(jnp.logical_not(is_last))
            def _steady():
                accumulate(o_ref, x, t, None)

            @pl.when(is_last)
            def _tail():
                row = jax.lax.broadcasted_iota(jnp.int32, (tr, 128), 0)
                lane = jax.lax.broadcasted_iota(jnp.int32, (tr, 128), 1)
                flat = (k_steps - 1) * tr * 128 + row * 128 + lane
                accumulate(o_ref, x, t, flat < d)

    return kernel


def _pick_chunks(k_steps, max_chunks):
    """Largest c <= max_chunks that divides k_steps (parallel row chunks)."""
    for c in range(min(max_chunks, k_steps), 0, -1):
        if k_steps % c == 0:
            return c
    return 1


def bce_iou_dice_loss(logits, target, *, tr_max=4096, max_row_chunks=2):
    """Pallas forward of BCEIOUDiceLoss. logits/target: (N, C, H, W) or any (N, ...)."""
    n = logits.shape[0]
    d = 1
    for s in logits.shape[1:]:
        d *= s

    # No wrapper-side upcast; the kernel casts per tile in registers, so bf16
    # inputs stream at half the HBM bytes (the lever that matters on v5e/v6e).
    x = logits.reshape(n, d)
    t = target.reshape(n, d)

    r = pl.cdiv(d, 128)
    if r * 128 != d:
        # TODO(synk): ragged D still materializes padded copies of x/t; the
        # common D % 128 == 0 fast path below never pads.
        pad = r * 128 - d
        x = jnp.pad(x, ((0, 0), (0, pad)))
        t = jnp.pad(t, ((0, 0), (0, pad)))
    x = x.reshape(n, r, 128)
    t = t.reshape(n, r, 128)

    # Row-tile size: multiple of 8 sublanes (or the full row count when r < 8).
    if r <= 8:
        tr = r
    else:
        tr = min(tr_max, (r // 8) * 8)
    k_steps = pl.cdiv(r, tr)
    c_chunks = _pick_chunks(k_steps, max_row_chunks)
    k_per = k_steps // c_chunks
    need_mask = (r * 128 != d) or (r % tr != 0)

    kernel = _make_kernel(d=d, tr=tr, k_steps=k_steps, k_per=k_per,
                          c_chunks=c_chunks, need_mask=need_mask)

    bytes_accessed = (int(x.size) * x.dtype.itemsize
                      + int(t.size) * t.dtype.itemsize
                      + n * c_chunks * 5 * 128 * 4)

    out = pl.pallas_call(
        kernel,
        out_shape=jax.ShapeDtypeStruct((n * c_chunks, 5, 1, 128), jnp.float32),
        grid_spec=pltpu.PrefetchScalarGridSpec(
            num_scalar_prefetch=0,
            grid=(n, c_chunks, k_per),
            in_specs=[
                pl.BlockSpec((1, tr, 128), lambda i, c, k: (i, c * k_per + k, 0)),
                pl.BlockSpec((1, tr, 128), lambda i, c, k: (i, c * k_per + k, 0)),
            ],
            out_specs=pl.BlockSpec((1, 5, 1, 128),
                                   lambda i, c, k: (i * c_chunks + c, 0, 0, 0)),
        ),
        compiler_params=pltpu.CompilerParams(
            dimension_semantics=("parallel", "parallel", "arbitrary"),
            vmem_limit_bytes=32 * 1024 * 1024,
        ),
        cost_estimate=pl.CostEstimate(
            flops=18 * n * d,
            transcendentals=3 * n * d,
            bytes_accessed=bytes_accessed,
        ),
    )(x, t)

    # (N*C, 5, 1, 128) partials -> (N, 5) sums (fold chunk + lane axes).
    sums = jnp.sum(out.reshape(n, c_chunks, 5, 128), axis=(1, 3))
    inter = sums[:, 0]
    pst = sums[:, 1]
    bce_sum = jnp.sum(sums[:, 2])
    iou_i = jnp.sum(sums[:, 3])
    iou_u = jnp.sum(sums[:, 4])

    smooth = 1e-5
    dice = 1.0 - jnp.sum((2.0 * inter + smooth) / (pst + smooth)) / n
    bce = bce_sum / (n * d)
    iou_loss = 1.0 - (iou_i + smooth) / (iou_u + smooth)
    return 0.33 * bce + 0.34 * dice + 0.33 * iou_loss


def _bce_iou_dice_ref(logits, target):
    """Pure-JAX reference mirroring the PyTorch BCEIOUDiceLoss forward."""
    x = logits.astype(jnp.float32)
    t = target.astype(jnp.float32)
    n = x.shape[0]
    smooth = 1e-5

    bce = jnp.mean(jnp.maximum(x, 0.0) - x * t + jnp.log1p(jnp.exp(-jnp.abs(x))))

    p = jax.nn.sigmoid(x).reshape(n, -1)
    tt = t.reshape(n, -1)
    dice = (2.0 * jnp.sum(p * tt, axis=1) + smooth) / (
        jnp.sum(p, axis=1) + jnp.sum(tt, axis=1) + smooth)
    dice = 1.0 - jnp.sum(dice) / n

    # IOULoss applied to the already-sigmoided probabilities (as in the reference).
    in_b = jax.nn.sigmoid(p) > 0.5
    tg_b = tt > 0.5
    inter = jnp.sum(in_b & tg_b)
    union = jnp.sum(in_b | tg_b)
    iou_loss = 1.0 - (inter + smooth) / (union + smooth)

    return 0.33 * bce + 0.34 * dice + 0.33 * iou_loss


if __name__ == "__main__":
    key = jax.random.PRNGKey(0)

    # Case 1: NCHW segmentation-style input, D % 128 == 0, single reduction step.
    k1, k2, key = (*jax.random.split(key, 2), key)
    x1 = jax.random.normal(k1, (2, 4, 16, 16), dtype=jnp.float32)
    y1 = jax.random.bernoulli(k2, 0.5, (2, 4, 16, 16)).astype(jnp.float32)
    got1 = jax.block_until_ready(bce_iou_dice_loss(x1, y1))
    ref1 = jax.block_until_ready(_bce_iou_dice_ref(x1, y1))
    assert jnp.allclose(got1, ref1, atol=1e-5, rtol=1e-4), (got1, ref1)

    # Case 2: larger spatial size, small tr_max -> multi-step reduction and
    # two parallel row chunks, unmasked fast path everywhere.
    k3, k4 = jax.random.split(jax.random.PRNGKey(1))
    x2 = jax.random.normal(k3, (2, 8, 64, 64), dtype=jnp.float32)
    y2 = jax.random.bernoulli(k4, 0.5, (2, 8, 64, 64)).astype(jnp.float32)
    got2 = jax.block_until_ready(bce_iou_dice_loss(x2, y2, tr_max=64))
    ref2 = jax.block_until_ready(_bce_iou_dice_ref(x2, y2))
    assert jnp.allclose(got2, ref2, atol=1e-5, rtol=1e-4), (got2, ref2)

    # Case 3: ragged D (not a multiple of 128), single masked step.
    k5, k6 = jax.random.split(jax.random.PRNGKey(2))
    x3 = jax.random.normal(k5, (2, 3, 10, 10), dtype=jnp.float32)
    y3 = jax.random.bernoulli(k6, 0.5, (2, 3, 10, 10)).astype(jnp.float32)
    got3 = jax.block_until_ready(bce_iou_dice_loss(x3, y3))
    ref3 = jax.block_until_ready(_bce_iou_dice_ref(x3, y3))
    assert jnp.allclose(got3, ref3, atol=1e-5, rtol=1e-4), (got3, ref3)

    # Case 4: ragged D with multiple row blocks + chunking -> exercises the
    # gated-mask path (unmasked steady state, masked last step only).
    k7, k8 = jax.random.split(jax.random.PRNGKey(3))
    x4 = jax.random.normal(k7, (2, 3, 40, 40), dtype=jnp.float32)
    y4 = jax.random.bernoulli(k8, 0.5, (2, 3, 40, 40)).astype(jnp.float32)
    got4 = jax.block_until_ready(bce_iou_dice_loss(x4, y4))
    ref4 = jax.block_until_ready(_bce_iou_dice_ref(x4, y4))
    assert jnp.allclose(got4, ref4, atol=1e-5, rtol=1e-4), (got4, ref4)

    print("KERNEL_OK")
</pallas_src>

<mosaic_0001>
module attributes {stable_mosaic.version = 11 : i64} {
  func.func @kernel(%arg0: i32, %arg1: i32, %arg2: i32, %arg3: memref<1x8x128xf32, #tpu.memory_space<vmem>>, %arg4: memref<1x8x128xf32, #tpu.memory_space<vmem>>, %arg5: memref<1x5x1x128xf32, #tpu.memory_space<vmem>>) attributes {dimension_semantics = [#tpu.dimension_semantics<parallel>, #tpu.dimension_semantics<parallel>, #tpu.dimension_semantics<arbitrary>], iteration_bounds = array<i64: 2, 1, 1>, scalar_prefetch = 0 : i64, scratch_operands = 0 : i64, tpu.core_type = #tpu.core_type<tc>, window_params = [{transform_indices = @transform_0, window_bounds = array<i64: 1, 8, 128>}, {transform_indices = @transform_1, window_bounds = array<i64: 1, 8, 128>}, {transform_indices = @transform_2, window_bounds = array<i64: 1, 5, 1, 128>}]} {
    %c0_i32 = arith.constant 0 : i32
    %0 = arith.cmpi eq, %arg2, %c0_i32 : i32
    %1 = arith.extui %0 : i1 to i32
    %c0_i32_0 = arith.constant 0 : i32
    %2 = arith.cmpi ne, %1, %c0_i32_0 : i32
    scf.if %2 {
      %cst_53 = arith.constant 0.000000e+00 : f32
      %77 = vector.broadcast %cst_53 : f32 to vector<1x5x1x128xf32>
      %c0_54 = arith.constant 0 : index
      %c0_55 = arith.constant 0 : index
      %c0_56 = arith.constant 0 : index
      %c0_57 = arith.constant 0 : index
      %78 = vector.load %arg5[%c0_54, %c0_55, %c0_56, %c0_57] : memref<1x5x1x128xf32, #tpu.memory_space<vmem>>, vector<1x5x1x128xf32>
      tpu.vector_store %arg5[%c0_54, %c0_55, %c0_56, %c0_57], %77 {strides = array<i32>} : memref<1x5x1x128xf32, #tpu.memory_space<vmem>>, vector<1x5x1x128xf32>,
    } else {
    }
    %c0 = arith.constant 0 : index
    %c0_1 = arith.constant 0 : index
    %c0_2 = arith.constant 0 : index
    %3 = vector.load %arg3[%c0, %c0_1, %c0_2] : memref<1x8x128xf32, #tpu.memory_space<vmem>>, vector<1x8x128xf32>
    %4 = vector.shape_cast %3 : vector<1x8x128xf32> to vector<8x128xf32>
    %c0_3 = arith.constant 0 : index
    %c0_4 = arith.constant 0 : index
    %c0_5 = arith.constant 0 : index
    %5 = vector.load %arg4[%c0_3, %c0_4, %c0_5] : memref<1x8x128xf32, #tpu.memory_space<vmem>>, vector<1x8x128xf32>
    %6 = vector.shape_cast %5 : vector<1x8x128xf32> to vector<8x128xf32>
    %7 = math.absf %4 : vector<8x128xf32>
    %cst = arith.constant 0.000000e+00 : f32
    %8 = vector.broadcast %cst : f32 to vector<8x128xf32>
    %9 = arith.subf %8, %7 : vector<8x128xf32>
    %10 = math.exp %9 : vector<8x128xf32>
    %cst_6 = arith.constant 1.000000e+00 : f32
    %11 = vector.broadcast %cst_6 : f32 to vector<8x128xf32>
    %12 = arith.addf %11, %10 : vector<8x128xf32>
    %cst_7 = arith.constant 1.000000e+00 : f32
    %13 = vector.broadcast %cst_7 : f32 to vector<8x128xf32>
    %14 = arith.divf %13, %12 : vector<8x128xf32>
    %cst_8 = arith.constant 0.000000e+00 : f32
    %15 = vector.broadcast %cst_8 : f32 to vector<8x128xf32>
    %16 = arith.cmpf oge, %4, %15 : vector<8x128xf32>
    %17 = arith.mulf %10, %14 : vector<8x128xf32>
    %18 = arith.select %16, %14, %17 : vector<8x128xi1>, vector<8x128xf32>
    %cst_9 = arith.constant 0.000000e+00 : f32
    %19 = vector.broadcast %cst_9 : f32 to vector<8x128xf32>
    %20 = arith.maximumf %4, %19 : vector<8x128xf32>
    %21 = arith.mulf %4, %6 : vector<8x128xf32>
    %22 = arith.subf %20, %21 : vector<8x128xf32>
    %23 = math.log1p %10 : vector<8x128xf32>
    %24 = arith.addf %22, %23 : vector<8x128xf32>
    %cst_10 = arith.constant 0.000000e+00 : f32
    %25 = vector.broadcast %cst_10 : f32 to vector<8x128xf32>
    %26 = arith.cmpf ogt, %18, %25 : vector<8x128xf32>
    %cst_11 = arith.constant 5.000000e-01 : f32
    %27 = vector.broadcast %cst_11 : f32 to vector<8x128xf32>
    %28 = arith.cmpf ogt, %6, %27 : vector<8x128xf32>
    %c0_12 = arith.constant 0 : index
    %c0_13 = arith.constant 0 : index
    %c0_14 = arith.constant 0 : index
    %c0_15 = arith.constant 0 : index
    %29 = vector.load %arg5[%c0_12, %c0_13, %c0_14, %c0_15] : memref<1x5x1x128xf32, #tpu.memory_space<vmem>>, vector<1x1x1x128xf32>
    %30 = vector.shape_cast %29 : vector<1x1x1x128xf32> to vector<1x128xf32>
    %31 = arith.mulf %18, %6 : vector<8x128xf32>
    %cst_16 = arith.constant dense<0.000000e+00> : vector<128xf32>
    %32 = vector.multi_reduction <add>, %31, %cst_16 [0] : vector<8x128xf32> to vector<128xf32>
    %33 = vector.shape_cast %32 : vector<128xf32> to vector<1x128xf32>
    %34 = arith.addf %30, %33 : vector<1x128xf32>
    %c0_17 = arith.constant 0 : index
    %c0_18 = arith.constant 0 : index
    %c0_19 = arith.constant 0 : index
    %c0_20 = arith.constant 0 : index
    %35 = vector.load %arg5[%c0_17, %c0_18, %c0_19, %c0_20] : memref<1x5x1x128xf32, #tpu.memory_space<vmem>>, vector<1x1x1x128xf32>
    %36 = vector.shape_cast %35 : vector<1x1x1x128xf32> to vector<1x128xf32>
    %37 = vector.shape_cast %34 : vector<1x128xf32> to vector<1x1x1x128xf32>
    tpu.vector_store %arg5[%c0_17, %c0_18, %c0_19, %c0_20], %37 {strides = array<i32>} : memref<1x5x1x128xf32, #tpu.memory_space<vmem>>, vector<1x1x1x128xf32>,
    %c0_21 = arith.constant 0 : index
    %c1 = arith.constant 1 : index
    %c0_22 = arith.constant 0 : index
    %c0_23 = arith.constant 0 : index
    %38 = vector.load %arg5[%c0_21, %c1, %c0_22, %c0_23] : memref<1x5x1x128xf32, #tpu.memory_space<vmem>>, vector<1x1x1x128xf32>
    %39 = vector.shape_cast %38 : vector<1x1x1x128xf32> to vector<1x128xf32>
    %40 = arith.addf %18, %6 : vector<8x128xf32>
    %cst_24 = arith.constant dense<0.000000e+00> : vector<128xf32>
    %41 = vector.multi_reduction <add>, %40, %cst_24 [0] : vector<8x128xf32> to vector<128xf32>
    %42 = vector.shape_cast %41 : vector<128xf32> to vector<1x128xf32>
    %43 = arith.addf %39, %42 : vector<1x128xf32>
    %c0_25 = arith.constant 0 : index
    %c1_26 = arith.constant 1 : index
    %c0_27 = arith.constant 0 : index
    %c0_28 = arith.constant 0 : index
    %44 = vector.load %arg5[%c0_25, %c1_26, %c0_27, %c0_28] : memref<1x5x1x128xf32, #tpu.memory_space<vmem>>, vector<1x1x1x128xf32>
    %45 = vector.shape_cast %44 : vector<1x1x1x128xf32> to vector<1x128xf32>
    %46 = vector.shape_cast %43 : vector<1x128xf32> to vector<1x1x1x128xf32>
    tpu.vector_store %arg5[%c0_25, %c1_26, %c0_27, %c0_28], %46 {strides = array<i32>} : memref<1x5x1x128xf32, #tpu.memory_space<vmem>>, vector<1x1x1x128xf32>,
    %c0_29 = arith.constant 0 : index
    %c2 = arith.constant 2 : index
    %c0_30 = arith.constant 0 : index
    %c0_31 = arith.constant 0 : index
    %47 = vector.load %arg5[%c0_29, %c2, %c0_30, %c0_31] : memref<1x5x1x128xf32, #tpu.memory_space<vmem>>, vector<1x1x1x128xf32>
    %48 = vector.shape_cast %47 : vector<1x1x1x128xf32> to vector<1x128xf32>
    %cst_32 = arith.constant dense<0.000000e+00> : vector<128xf32>
    %49 = vector.multi_reduction <add>, %24, %cst_32 [0] : vector<8x128xf32> to vector<128xf32>
    %50 = vector.shape_cast %49 : vector<128xf32> to vector<1x128xf32>
    %51 = arith.addf %48, %50 : vector<1x128xf32>
    %c0_33 = arith.constant 0 : index
    %c2_34 = arith.constant 2 : index
    %c0_35 = arith.constant 0 : index
    %c0_36 = arith.constant 0 : index
    %52 = vector.load %arg5[%c0_33, %c2_34, %c0_35, %c0_36] : memref<1x5x1x128xf32, #tpu.memory_space<vmem>>, vector<1x1x1x128xf32>
    %53 = vector.shape_cast %52 : vector<1x1x1x128xf32> to vector<1x128xf32>
    %54 = vector.shape_cast %51 : vector<1x128xf32> to vector<1x1x1x128xf32>
    tpu.vector_store %arg5[%c0_33, %c2_34, %c0_35, %c0_36], %54 {strides = array<i32>} : memref<1x5x1x128xf32, #tpu.memory_space<vmem>>, vector<1x1x1x128xf32>,
    %c0_37 = arith.constant 0 : index
    %c3 = arith.constant 3 : index
    %c0_38 = arith.constant 0 : index
    %c0_39 = arith.constant 0 : index
    %55 = vector.load %arg5[%c0_37, %c3, %c0_38, %c0_39] : memref<1x5x1x128xf32, #tpu.memory_space<vmem>>, vector<1x1x1x128xf32>
    %56 = vector.shape_cast %55 : vector<1x1x1x128xf32> to vector<1x128xf32>
    %57 = arith.andi %26, %28 : vector<8x128xi1>
    %58 = arith.extui %57 : vector<8x128xi1> to vector<8x128xi32>
    %59 = arith.sitofp %58 : vector<8x128xi32> to vector<8x128xf32>
    %cst_40 = arith.constant dense<0.000000e+00> : vector<128xf32>
    %60 = vector.multi_reduction <add>, %59, %cst_40 [0] : vector<8x128xf32> to vector<128xf32>
    %61 = vector.shape_cast %60 : vector<128xf32> to vector<1x128xf32>
    %62 = arith.addf %56, %61 : vector<1x128xf32>
    %c0_41 = arith.constant 0 : index
    %c3_42 = arith.constant 3 : index
    %c0_43 = arith.constant 0 : index
    %c0_44 = arith.constant 0 : index
    %63 = vector.load %arg5[%c0_41, %c3_42, %c0_43, %c0_44] : memref<1x5x1x128xf32, #tpu.memory_space<vmem>>, vector<1x1x1x128xf32>
    %64 = vector.shape_cast %63 : vector<1x1x1x128xf32> to vector<1x128xf32>
    %65 = vector.shape_cast %62 : vector<1x128xf32> to vector<1x1x1x128xf32>
    tpu.vector_store %arg5[%c0_41, %c3_42, %c0_43, %c0_44], %65 {strides = array<i32>} : memref<1x5x1x128xf32, #tpu.memory_space<vmem>>, vector<1x1x1x128xf32>,
    %c0_45 = arith.constant 0 : index
    %c4 = arith.constant 4 : index
    %c0_46 = arith.constant 0 : index
    %c0_47 = arith.constant 0 : index
    %66 = vector.load %arg5[%c0_45, %c4, %c0_46, %c0_47] : memref<1x5x1x128xf32, #tpu.memory_space<vmem>>, vector<1x1x1x128xf32>
    %67 = vector.shape_cast %66 : vector<1x1x1x128xf32> to vector<1x128xf32>
    %68 = arith.ori %26, %28 : vector<8x128xi1>
    %69 = arith.extui %68 : vector<8x128xi1> to vector<8x128xi32>
    %70 = arith.sitofp %69 : vector<8x128xi32> to vector<8x128xf32>
    %cst_48 = arith.constant dense<0.000000e+00> : vector<128xf32>
    %71 = vector.multi_reduction <add>, %70, %cst_48 [0] : vector<8x128xf32> to vector<128xf32>
    %72 = vector.shape_cast %71 : vector<128xf32> to vector<1x128xf32>
    %73 = arith.addf %67, %72 : vector<1x128xf32>
    %c0_49 = arith.constant 0 : index
    %c4_50 = arith.constant 4 : index
    %c0_51 = arith.constant 0 : index
    %c0_52 = arith.constant 0 : index
    %74 = vector.load %arg5[%c0_49, %c4_50, %c0_51, %c0_52] : memref<1x5x1x128xf32, #tpu.memory_space<vmem>>, vector<1x1x1x128xf32>
    %75 = vector.shape_cast %74 : vector<1x1x1x128xf32> to vector<1x128xf32>
    %76 = vector.shape_cast %73 : vector<1x128xf32> to vector<1x1x1x128xf32>
    tpu.vector_store %arg5[%c0_49, %c4_50, %c0_51, %c0_52], %76 {strides = array<i32>} : memref<1x5x1x128xf32, #tpu.memory_space<vmem>>, vector<1x1x1x128xf32>,
    return
  }
  func.func @transform_0(%arg0: i32, %arg1: i32, %arg2: i32) -> (i32, i32, i32) {
    %c1_i32 = arith.constant 1 : i32
    %0 = arith.muli %arg1, %c1_i32 : i32
    %1 = arith.addi %0, %arg2 : i32
    %c0_i32 = arith.constant 0 : i32
    %c0_i32_0 = arith.constant 0 : i32
    return %arg0, %1, %c0_i32 : i32, i32, i32
  }
  func.func @transform_1(%arg0: i32, %arg1: i32, %arg2: i32) -> (i32, i32, i32) {
    %c1_i32 = arith.constant 1 : i32
    %0 = arith.muli %arg1, %c1_i32 : i32
    %1 = arith.addi %0, %arg2 : i32
    %c0_i32 = arith.constant 0 : i32
    %c0_i32_0 = arith.constant 0 : i32
    return %arg0, %1, %c0_i32 : i32, i32, i32
  }
  func.func @transform_2(%arg0: i32, %arg1: i32, %arg2: i32) -> (i32, i32, i32, i32) {
    %c1_i32 = arith.constant 1 : i32
    %0 = arith.muli %arg0, %c1_i32 : i32
    %1 = arith.addi %0, %arg1 : i32
    %c0_i32 = arith.constant 0 : i32
    %c0_i32_0 = arith.constant 0 : i32
    %c0_i32_1 = arith.constant 0 : i32
    %c0_i32_2 = arith.constant 0 : i32
    return %1, %c0_i32, %c0_i32_0, %c0_i32_1 : i32, i32, i32, i32
  }
}

</mosaic_0001>

<llo_original>
// kernel: tpu_custom_call.1
$region0: #{tpu_custom_call.1}
  #allocation0 [shape = 'u32[]', space=smem, size = 0x4, offset = 0x4, fixed_abs, tag = 'smem constant byte address 0x4 - core index']
  #allocation1 [shape = 'u32[72,128]{1,0:T(1,128)}', space=vmem, size = 0x9000, scoped, tag = 'internal scratch']
  %s0 = inlined_call_operand.hbm [shape: f32[2,8,128], index: 0, kind: input, shape index: {}]
  %s1 = inlined_call_operand.hbm [shape: f32[2,8,128], index: 1, kind: input, shape index: {}]
  %s2 = inlined_call_operand.hbm [shape: f32[2,5,1,128], index: 2, kind: output, shape index: {}]
  %s3 = sld [smem:[#allocation0]]
  $region53: #{tpu_custom_call.1} parent=0
    _
  %s5 = ssub.s32 1, %s3
  %s6 = scalar_select 0, %s5, %s3
  $region1: #{tpu_custom_call.1} parent=0
    #allocation2 [shape = 'u8[8192]{0}', space=vmem, size = 0x2000, scoped, tag = 'input window, operand 0']
    #allocation3 [shape = 's32[2]{0}', space=sflag, size = 0x8, scoped, tag = 'scoped memory for tpu_custom_call.1']
    #allocation4 [shape = 's32[2]{0}', space=sflag, size = 0x8, scoped, tag = 'scoped memory for tpu_custom_call.1']
    #allocation5 [shape = 'u8[8192]{0}', space=vmem, size = 0x2000, scoped, tag = 'input window, operand 1']
    #allocation6 [shape = 's32[2]{0}', space=sflag, size = 0x8, scoped, tag = 'scoped memory for tpu_custom_call.1']
    #allocation7 [shape = 'u8[5120]{0}', space=vmem, size = 0x1400, scoped, tag = 'output window, operand 0']
    %7 = vsyncpa [#allocation3], 0
    %s8 = scalar_lea.sflag [#allocation3], 1
    %9 = vsyncpa %s8, 0
    %10 = vsyncpa [#allocation6], 0
    %s11 = scalar_lea.sflag [#allocation6], 1
    %12 = vsyncpa %s11, 0
    %13 = vsyncpa [#allocation4], 0
    %s14 = scalar_lea.sflag [#allocation4], 1
    %15 = vsyncpa %s14, 0
    loop: start=0, step=1, limit=4
    $region2: #{tpu_custom_call.1} parent=1 // loop_pre_header
      _
    $region3: #{tpu_custom_call.1} parent=1 // loop_header
      %s17 = sphi 0, %s21
      %p18 = scmp.ge.s32.totalorder %s17, 4
      %s24 = sphi 0, %s43
      %s25 = sphi 0, %s39
      %s26 = sphi 0, %s35
      %s27 = sphi 0, %s24
      %s28 = sphi 0, %s25
      %s29 = sphi 0, %s26
      %s30 = sphi 0, %s27
      %s31 = sphi 0, %s28
      %s32 = sphi 0, %s29
      %s50 = sphi 0, %s52
      %s53 = sphi 0, %s50
      %s54 = sphi 0, %s53
      %s70 = sphi 0, %s54
      %s80 = sphi 0, %s82
      %s83 = sphi 0, %s80
      %s84 = sphi 0, %s83
      %s100 = sphi 0, %s84
      %s108 = sphi 0, %s110
      %s111 = sphi 0, %s108
      %s112 = sphi 0, %s111
      %s128 = sphi 0, %s112
    $region4: #{tpu_custom_call.1} parent=1 // loop_header_branch
      %20 = sbr.rel (%p18) target = $region8
    $region5: #{tpu_custom_call.1} parent=1 // loop_body
      %s22 = ssub.s32 %s17, 1
      %s23 = ssub.s32 %s17, 2
      %s33 = sadd.s32 1, %s26
      %p34 = scmp.ge.s32.totalorder %s33, 1
      %s35 = scalar_select %p34, 0, %s33
      %s36 = sadd.s32 1, %s25
      %s37 = scalar_select %p34, %s36, %s25
      %p38 = scmp.ge.s32.totalorder %s37, 1
      %s39 = scalar_select %p38, 0, %s37
      %s40 = sadd.s32 1, %s24
      %s41 = scalar_select %p38, %s40, %s24
      %p42 = scmp.ge.s32.totalorder %s41, 2
      %s43 = scalar_select %p42, 0, %s41
      %s44 = sadd.s32 %s25, %s26
      %s45 = sadd.s32 %s39, %s35
      %s46 = ssub.s32 %s24, %s43
      %s47 = ssub.s32 %s44, %s45
      %s48 = sor.u32 %s46, %s47
      %p49 = scmp.eq.s32.totalorder %s48, 0
      %s51 = sadd.s32 %s50, 1
      %s52 = scalar_select %p49, %s50, %s51
      %p55 = pneg %p49
      %p56 = scmp.eq.s32.totalorder %s17, 1
      %p57 = por %p55, %p56
      %p58 = scmp.ne.s32.totalorder %s50, %s53
      %p59 = scmp.eq.s32.totalorder %s17, 0
      %p60 = por %p58, %p59
      %p61 = scmp.ne.s32.totalorder %s50, %s53
      %p62 = scmp.eq.s32.totalorder %s22, 1
      %p63 = por %p61, %p62
      %p64 = scmp.ne.s32.totalorder %s53, %s54
      %p65 = scmp.eq.s32.totalorder %s22, 0
      %p66 = por %p64, %p65
      %p67 = scmp.ne.s32.totalorder %s53, %s54
      %p68 = scmp.eq.s32.totalorder %s23, 1
      %p69 = por %p67, %p68
      %p71 = scmp.ne.s32.totalorder %s54, %s70
      %p72 = scmp.eq.s32.totalorder %s23, 0
      %p73 = por %p71, %p72
      %s74 = sadd.s32 %s25, %s26
      %s75 = sadd.s32 %s39, %s35
      %s76 = ssub.s32 %s24, %s43
      %s77 = ssub.s32 %s74, %s75
      %s78 = sor.u32 %s76, %s77
      %p79 = scmp.eq.s32.totalorder %s78, 0
      %s81 = sadd.s32 %s80, 1
      %s82 = scalar_select %p79, %s80, %s81
      %p85 = pneg %p79
      %p86 = scmp.eq.s32.totalorder %s17, 1
      %p87 = por %p85, %p86
      %p88 = scmp.ne.s32.totalorder %s80, %s83
      %p89 = scmp.eq.s32.totalorder %s17, 0
      %p90 = por %p88, %p89
      %p91 = scmp.ne.s32.totalorder %s80, %s83
      %p92 = scmp.eq.s32.totalorder %s22, 1
      %p93 = por %p91, %p92
      %p94 = scmp.ne.s32.totalorder %s83, %s84
      %p95 = scmp.eq.s32.totalorder %s22, 0
      %p96 = por %p94, %p95
      %p97 = scmp.ne.s32.totalorder %s83, %s84
      %p98 = scmp.eq.s32.totalorder %s23, 1
      %p99 = por %p97, %p98
      %p101 = scmp.ne.s32.totalorder %s84, %s100
      %p102 = scmp.eq.s32.totalorder %s23, 0
      %p103 = por %p101, %p102
      %s104 = sadd.s32 %s24, %s25
      %s105 = sadd.s32 %s43, %s39
      %s106 = ssub.s32 %s104, %s105
      %p107 = scmp.eq.s32.totalorder %s106, 0
      %s109 = sadd.s32 %s108, 1
      %s110 = scalar_select %p107, %s108, %s109
      %p113 = pneg %p107
      %p114 = scmp.eq.s32.totalorder %s17, 1
      %p115 = por %p113, %p114
      %p116 = scmp.ne.s32.totalorder %s108, %s111
      %p117 = scmp.eq.s32.totalorder %s17, 0
      %p118 = por %p116, %p117
      %p119 = scmp.ne.s32.totalorder %s108, %s111
      %p120 = scmp.eq.s32.totalorder %s22, 1
      %p121 = por %p119, %p120
      %p122 = scmp.ne.s32.totalorder %s111, %s112
      %p123 = scmp.eq.s32.totalorder %s22, 0
      %p124 = por %p122, %p123
      %p125 = scmp.ne.s32.totalorder %s111, %s112
      %p126 = scmp.eq.s32.totalorder %s23, 1
      %p127 = por %p125, %p126
      %p129 = scmp.ne.s32.totalorder %s112, %s128
      %p130 = scmp.eq.s32.totalorder %s23, 0
      %p131 = por %p129, %p130
      %p132 = scmp.le.s32.totalorder 1, %s17
      %p133 = scmp.lt.s32.totalorder %s17, 3
      %p134 = pnand %p132, %p133
      %p135 = pneg %p134
      // Predicated region
      $region9: #{tpu_custom_call.1} parent=5 // pred_check
        _
      $region10: #{tpu_custom_call.1} parent=5 // pred_check_branch
        %137 = sbr.rel (%p134) target = $region12
      $region11: #{tpu_custom_call.1} parent=5 // pred_region
        %s138 = ssub.s32 %s17, 1
      $region12: #{tpu_custom_call.1} parent=5 // pred_fallthru
        _
      %p139 = scmp.lt.s32.totalorder %s17, 2
      // Predicated region
      $region13: #{tpu_custom_call.1} parent=5 // pred_check
        %p140 = pneg %p139
      $region14: #{tpu_custom_call.1} parent=5 // pred_check_branch
        %142 = sbr.rel (%p140) target = $region16
      $region15: #{tpu_custom_call.1} parent=5 // pred_region
        // Predicated region
        $region17: #{tpu_custom_call.1} parent=15 // pred_check
          %p143 = pneg %p60
        $region18: #{tpu_custom_call.1} parent=15 // pred_check_branch
          %145 = sbr.rel (%p143) target = $region20
        $region19: #{tpu_custom_call.1} parent=15 // pred_region
          %s146 = sand.u32 %s50, 1
          %s147 = scalar_lea.sflag [#allocation3], %s146
          %s148 = sand.u32 %s50, 1
          %s149 = smul.addr %s148, 8
          %s150 = scalar_lea.vmem [#allocation2], %s149
          %s151 = sadd.s32 %s25, %s26
          %153 = vsyncadd %s147, 0
          %s154 = sadd.s32 %s151, %s24
          %s155 = smul.addr %s154, 8
          %s156 = scalar_lea.hbm %s0, %s155
          %s158 = sshll.u32 %s156, 4
          %s159 = int_to_ptr.hbm [resolvable:$true] %s158
          %s160 = sshll.u32 %s150, 4
          %s161 = int_to_ptr.vmem [resolvable:$true] %s160
          %163 = dma.hbm_to_vmem [thread:$0]  %s159, 128, %s161, %s147
        $region20: #{tpu_custom_call.1} parent=15 // pred_fallthru
          _
        // Predicated region
        $region21: #{tpu_custom_call.1} parent=15 // pred_check
          %p164 = pneg %p90
        $region22: #{tpu_custom_call.1} parent=15 // pred_check_branch
          %166 = sbr.rel (%p164) target = $region24
        $region23: #{tpu_custom_call.1} parent=15 // pred_region
          %s167 = sand.u32 %s80, 1
          %s168 = scalar_lea.sflag [#allocation6], %s167
          %s169 = sand.u32 %s80, 1
          %s170 = smul.addr %s169, 8
          %s171 = scalar_lea.vmem [#allocation5], %s170
          %s172 = sadd.s32 %s25, %s26
          %174 = vsyncadd %s168, 0
          %s175 = sadd.s32 %s172, %s24
          %s176 = smul.addr %s175, 8
          %s177 = scalar_lea.hbm %s1, %s176
          %s179 = sshll.u32 %s177, 4
          %s180 = int_to_ptr.hbm [resolvable:$true] %s179
          %s181 = sshll.u32 %s171, 4
          %s182 = int_to_ptr.vmem [resolvable:$true] %s181
          %184 = dma.hbm_to_vmem [thread:$0]  %s180, 128, %s182, %s168
        $region24: #{tpu_custom_call.1} parent=15 // pred_fallthru
          _
      $region16: #{tpu_custom_call.1} parent=5 // pred_fallthru
        _
      %p185 = scmp.le.s32.totalorder 1, %s17
      %p186 = scmp.lt.s32.totalorder %s17, 3
      %p187 = pnand %p185, %p186
      %p188 = pneg %p187
      // Predicated region
      $region25: #{tpu_custom_call.1} parent=5 // pred_check
        _
      $region26: #{tpu_custom_call.1} parent=5 // pred_check_branch
        %190 = sbr.rel (%p187) target = $region28
      $region27: #{tpu_custom_call.1} parent=5 // pred_region
        %s191 = ssub.s32 %s17, 1
        %s192 = sand.u32 %s53, 1
        %s193 = scalar_lea.sflag [#allocation3], %s192
        %s194 = sand.u32 %s53, 1
        %s195 = smul.addr %s194, 8
        %s196 = scalar_lea.vmem [#allocation2], %s195
        // Predicated region
        $region29: #{tpu_custom_call.1} parent=27 // pred_check
          %p197 = pneg %p66
        $region30: #{tpu_custom_call.1} parent=27 // pred_check_branch
          %199 = sbr.rel (%p197) target = $region32
        $region31: #{tpu_custom_call.1} parent=27 // pred_region
          %201 = dma.done %s193, 128
        $region32: #{tpu_custom_call.1} parent=27 // pred_fallthru
          _
        %s202 = sand.u32 %s83, 1
        %s203 = scalar_lea.sflag [#allocation6], %s202
        %s204 = sand.u32 %s83, 1
        %s205 = smul.addr %s204, 8
        %s206 = scalar_lea.vmem [#allocation5], %s205
        // Predicated region
        $region33: #{tpu_custom_call.1} parent=27 // pred_check
          %p207 = pneg %p96
        $region34: #{tpu_custom_call.1} parent=27 // pred_check_branch
          %209 = sbr.rel (%p207) target = $region36
        $region35: #{tpu_custom_call.1} parent=27 // pred_region
          %211 = dma.done %s203, 128
        $region36: #{tpu_custom_call.1} parent=27 // pred_fallthru
          _
        %s212 = sand.u32 %s53, 1
        %s213 = scalar_lea.sflag [#allocation3], %s212
        %s214 = sand.u32 %s53, 1
        %s215 = smul.addr %s214, 8
        %s216 = scalar_lea.vmem [#allocation2], %s215
        %p217 = pneg %p66
        %p218 = pneg %p63
        %s219 = sand.u32 %s83, 1
        %s220 = scalar_lea.sflag [#allocation6], %s219
        %s221 = sand.u32 %s83, 1
        %s222 = smul.addr %s221, 8
        %s223 = scalar_lea.vmem [#allocation5], %s222
        %p224 = pneg %p96
        %p225 = pneg %p93
        %p226 = pneg %p124
        %p227 = pneg %p121
        %s228 = sand.u32 %s111, 1
        %s229 = scalar_lea.sflag [#allocation4], %s228
        %s230 = sand.u32 %s111, 1
        %s231 = smul.addr %s230, 5
        %s232 = scalar_lea.vmem [#allocation7], %s231
        %s233 = sadd.s32 %s28, %s29
        %s234 = sadd.s32 %s28, %s29
        %s235 = sadd.s32 %s27, %s28
        %p236 = scmp.eq.s32.totalorder %s29, 0
        // Predicated region
        $region37: #{tpu_custom_call.1} parent=27 // pred_check
          %p237 = pneg %p236
        $region38: #{tpu_custom_call.1} parent=27 // pred_check_branch
          %239 = sbr.rel (%p237) target = $region40
        $region39: #{tpu_custom_call.1} parent=27 // pred_region
          %240 = vst [vmem:[%s232] sm:$0x1] 0.0
          %241 = vst [vmem:[%s232 + $0x1] sm:$0x1] 0.0
          %242 = vst [vmem:[%s232 + $0x2] sm:$0x1] 0.0
          %243 = vst [vmem:[%s232 + $0x3] sm:$0x1] 0.0
          %244 = vst [vmem:[%s232 + $0x4] sm:$0x1] 0.0
        $region40: #{tpu_custom_call.1} parent=27 // pred_fallthru
          _
        %v245 = vld [vmem:[%s196] sm:$0xff]
        %v246 = vld [vmem:[%s206] sm:$0xff]
        %v247 = vand.u32 2147483647, %v245
        %v248 = vsub.f32 0.0, %v247
        %v249 = vmul.f32 %v248, 1.442695
        %v250 = vpow.pop %v249
        %v251 = vadd.f32 %v250, 1.0
        %v252 = vrcp.pop %v251
        %v253 = vmul.f32 %v251, %v252
        %v254 = vsub.f32 1.0, %v253
        %v255 = vmul.f32 %v252, %v254
        %v256 = vadd.f32 %v252, %v255
        %vm257 = vweird.f32 %v251
        %vm258 = vweird.f32 %v252
        %vm259 = vmor %vm257, %vm258
        %v260 = vsel %vm259, %v252, %v256
        %v261 = vand.u32 2147483647, %v251
        %vm262 = vcmp.eq.f32.partialorder %v261, 8.507059e+37
        %v263 = vand.u32 %v251, 2147483648
        %v264 = vor.u32 1.1754944e-38, %v263
        %v265 = vsel %vm262, %v264, %v260
        %v266 = vmul.f32 1.0, %v265
        %vm267 = vcmp.ge.f32.partialorder %v245, 0.0
        %v268 = vmul.f32 %v250, %v266
        %v269 = vsel %vm267, %v266, %v268
        %v270 = vmax.f32 %v245, 0.0
        %v271 = vmul.f32 %v245, %v246
        %v272 = vsub.f32 %v270, %v271
        %v273 = vadd.f32 %v250, 1.0
        %v274 = vlog2.pop %v273
        %v275 = vmul.f32 %v274, 0.6931472
        %v276 = vmul.f32 -0.5, %v250
        %v277 = vadd.f32 %v276, 1.0
        %v278 = vmul.f32 %v277, %v250
        %v279 = vand.u32 2147483647, %v250
        %vm280 = vcmp.lt.f32.partialorder %v279, 0.0004427343
        %v281 = vsel %vm280, %v278, %v275
        %v282 = vadd.f32 %v272, %v281
        %vm283 = vcmp.gt.f32.partialorder %v269, 0.0
        %vm284 = vcmp.gt.f32.partialorder %v246, 0.5
        %v285 = vld [vmem:[%s232] sm:$0x1]
        %v286 = vmul.f32 %v269, %v246
        %v287 = vrot.slane %v286, 4
        %v288 = vadd.f32 %v286, %v287
        %v289 = vrot.slane %v288, 2
        %v290 = vadd.f32 %v288, %v289
        %v291 = vrot.slane %v290, 1
        %v292 = vadd.f32 %v290, %v291
        %v293 = vadd.f32 %v285, %v292
        %294 = vst [vmem:[%s232] sm:$0x1] %v293
        %s295 = scalar_lea.vmem %s232, 1 [#allocation7]
        %v296 = vld [vmem:[%s295] sm:$0x1]
        %v297 = vadd.f32 %v269, %v246
        %v298 = vrot.slane %v297, 4
        %v299 = vadd.f32 %v297, %v298
        %v300 = vrot.slane %v299, 2
        %v301 = vadd.f32 %v299, %v300
        %v302 = vrot.slane %v301, 1
        %v303 = vadd.f32 %v301, %v302
        %v304 = vadd.f32 %v296, %v303
        %305 = vst [vmem:[%s295] sm:$0x1] %v304
        %s306 = scalar_lea.vmem %s232, 2 [#allocation7]
        %v307 = vld [vmem:[%s306] sm:$0x1]
        %v308 = vrot.slane %v282, 4
        %v309 = vadd.f32 %v282, %v308
        %v310 = vrot.slane %v309, 2
        %v311 = vadd.f32 %v309, %v310
        %v312 = vrot.slane %v311, 1
        %v313 = vadd.f32 %v311, %v312
        %v314 = vadd.f32 %v307, %v313
        %315 = vst [vmem:[%s306] sm:$0x1] %v314
        %s316 = scalar_lea.vmem %s232, 3 [#allocation7]
        %v317 = vld [vmem:[%s316] sm:$0x1]
        %vm318 = vmand %vm283, %vm284
        %v319 = vsel %vm318, 1, 0
        %v320 = vcvt.s32.f32 %v319
        %v321 = vrot.slane %v320, 4
        %v322 = vadd.f32 %v320, %v321
        %v323 = vrot.slane %v322, 2
        %v324 = vadd.f32 %v322, %v323
        %v325 = vrot.slane %v324, 1
        %v326 = vadd.f32 %v324, %v325
        %v327 = vadd.f32 %v317, %v326
        %328 = vst [vmem:[%s316] sm:$0x1] %v327
        %s329 = scalar_lea.vmem %s232, 4 [#allocation7]
        %v330 = vld [vmem:[%s329] sm:$0x1]
        %vm331 = vmor %vm283, %vm284
        %v332 = vsel %vm331, 1, 0
        %v333 = vcvt.s32.f32 %v332
        %v334 = vrot.slane %v333, 4
        %v335 = vadd.f32 %v333, %v334
        %v336 = vrot.slane %v335, 2
        %v337 = vadd.f32 %v335, %v336
        %v338 = vrot.slane %v337, 1
        %v339 = vadd.f32 %v337, %v338
        %v340 = vadd.f32 %v330, %v339
        %341 = vst [vmem:[%s329] sm:$0x1] %v340
        %s342 = sand.u32 %s111, 1
        %s343 = scalar_lea.sflag [#allocation4], %s342
        %s344 = sand.u32 %s111, 1
        %s345 = smul.addr %s344, 5
        %s346 = scalar_lea.vmem [#allocation7], %s345
        // Predicated region
        $region41: #{tpu_custom_call.1} parent=27 // pred_check
          %p347 = pneg %p121
        $region42: #{tpu_custom_call.1} parent=27 // pred_check_branch
          %349 = sbr.rel (%p347) target = $region44
        $region43: #{tpu_custom_call.1} parent=27 // pred_region
          %s350 = sadd.s32 %s27, %s28
          %352 = vsyncadd %s343, 0
          %s353 = smul.addr %s350, 5
          %s354 = scalar_lea.hbm %s2, %s353
          %s355 = sshll.u32 %s346, 4
          %s356 = int_to_ptr.vmem [resolvable:$true] %s355
          %s357 = sshll.u32 %s354, 4
          %s358 = int_to_ptr.hbm [resolvable:$true] %s357
          %363 = dma.vmem_to_hbm [thread:$0]  %s356, 80, %s358, %s343, 16, 16, 1
        $region44: #{tpu_custom_call.1} parent=27 // pred_fallthru
          _
      $region28: #{tpu_custom_call.1} parent=5 // pred_fallthru
        _
      %p364 = scmp.le.s32.totalorder 2, %s17
      // Predicated region
      $region45: #{tpu_custom_call.1} parent=5 // pred_check
        %p365 = pneg %p364
      $region46: #{tpu_custom_call.1} parent=5 // pred_check_branch
        %367 = sbr.rel (%p365) target = $region48
      $region47: #{tpu_custom_call.1} parent=5 // pred_region
        %s368 = ssub.s32 %s17, 2
        // Predicated region
        $region49: #{tpu_custom_call.1} parent=47 // pred_check
          %p369 = pneg %p127
        $region50: #{tpu_custom_call.1} parent=47 // pred_check_branch
          %371 = sbr.rel (%p369) target = $region52
        $region51: #{tpu_custom_call.1} parent=47 // pred_region
          %s372 = sand.u32 %s112, 1
          %s373 = scalar_lea.sflag [#allocation4], %s372
          %s374 = sand.u32 %s112, 1
          %s375 = smul.addr %s374, 5
          %s376 = scalar_lea.vmem [#allocation7], %s375
          %378 = dma.done %s373, 80
        $region52: #{tpu_custom_call.1} parent=47 // pred_fallthru
          _
      $region48: #{tpu_custom_call.1} parent=5 // pred_fallthru
        _
    $region6: #{tpu_custom_call.1} parent=1 // loop_footer
      %s21 = sadd.s32 1, %s17
    $region7: #{tpu_custom_call.1} parent=1 // loop_footer_branch
      %16 = sbr.rel target = $region3
    $region8: #{tpu_custom_call.1} parent=1 // loop_exit
      _
    %379 = vsyncpa [#allocation3], 1
    %s380 = scalar_lea.sflag [#allocation3], 1
    %381 = vsyncpa %s380, 1
    %382 = vsyncpa [#allocation6], 1
    %s383 = scalar_lea.sflag [#allocation6], 1
    %384 = vsyncpa %s383, 1
    %385 = vsyncpa [#allocation4], 1
    %s386 = scalar_lea.sflag [#allocation4], 1
    %387 = vsyncpa %s386, 1

</llo_original>
